<compile_context>
chip_gen: v5e
topology: v5e:2x2
jax: 0.10.0
libtpu: 0.0.40
codegen_flags: <defaults>
</compile_context>

<pallas_src>
import functools

import jax
import jax.numpy as jnp
from jax.experimental import pallas as pl
from jax.experimental.pallas import tpu as pltpu


def _round_up(x, m):
    return -(-x // m) * m


def _fused_cnn1d_kernel(x_ref, mask_ref, *rest, cfgs, Bt, L):
    # x_ref    : (Bt, L, C0)   activation block (compute_dtype), channels on lanes
    # mask_ref : (Bt*L, 1)     flattened sequence mask (f32) for this block
    # rest     : 4 param refs per layer (w, bias, bn_scale, bn_shift),
    #            then o_ref (Bt*L, C_last), then one VMEM pad-scratch per layer
    n = len(cfgs)
    param_refs = rest[:4 * n]
    o_ref = rest[4 * n]
    pad_refs = rest[4 * n + 1:]

    rows = Bt * L
    mask = mask_ref[...]                               # (rows, 1) f32
    cur = x_ref[...]                                   # (Bt, L, C0) compute_dtype

    for i, cfg in enumerate(cfgs):
        w_ref, b_ref, s_ref, sh_ref = param_refs[4 * i:4 * i + 4]
        k, d, pad, pad8 = cfg["k"], cfg["d"], cfg["pad"], cfg["pad8"]
        cin, cout = cfg["cin"], cfg["cout"]
        xpad = pad_refs[i]                             # (Bt, pad8+L+pad8, cin)

        # Zero only the halo slices (aligned offsets/lengths); the interior is
        # fully overwritten every step, so no full-buffer zeroing.
        if pad8 > 0:
            xpad[:, 0:pad8, :] = jnp.zeros((Bt, pad8, cin), xpad.dtype)
            xpad[:, pad8 + L:pad8 + L + pad8, :] = jnp.zeros(
                (Bt, pad8, cin), xpad.dtype)
        # Sublane-aligned interior store; single cast to compute_dtype here.
        xpad[:, pad8:pad8 + L, :] = cur.astype(xpad.dtype)

        if cin % 128 == 0:
            # Per-tap matmul accumulation: no (rows, k*cin) im2col slab.
            acc = None
            for t in range(k):
                base = pad8 - pad + t * d              # static offset
                tap = xpad[:, base:base + L, :].reshape(rows, cin)
                part = jnp.dot(tap, w_ref[t * cin:(t + 1) * cin, :],
                               preferred_element_type=jnp.float32)
                acc = part if acc is None else acc + part
        else:
            # Small cin: lane-concatenated im2col slab, single matmul K=k*cin.
            cols = [xpad[:, pad8 - pad + t * d:pad8 - pad + t * d + L, :]
                    .reshape(rows, cin) for t in range(k)]
            slab = cols[0] if k == 1 else jnp.concatenate(cols, axis=-1)
            acc = jnp.dot(slab, w_ref[...],
                          preferred_element_type=jnp.float32)

        acc = acc + b_ref[...]                         # conv bias (1, cout), f32
        y = jnp.maximum(acc, 0.0)                      # ReLU
        y = y * s_ref[...] + sh_ref[...]               # folded BatchNorm (eval)
        y = y * mask                                   # sequence mask
        # Dropout(p=0) is the identity.

        if i + 1 < n:
            cur = y.reshape(Bt, L, cout)               # stays on-chip (f32),
        else:                                          # cast at next xpad store
            o_ref[...] = y.astype(o_ref.dtype)


def _pick_batch_tile(B, L, max_rows=1024):
    """Largest divisor Bt of B with Bt*L <= max_rows; prefer an even number of
    grid steps (both v7x TensorCores get work) when it costs < 2x in rows."""
    cands = [bt for bt in range(1, B + 1) if B % bt == 0 and bt * L <= max_rows]
    if not cands:
        return 1
    best = max(cands)
    even = [bt for bt in cands if (B // bt) % 2 == 0]
    if even and 2 * max(even) >= best:
        return max(even)
    return best


def _vmem_limit_bytes(Bt, L8, C0, cfgs, compute_dtype, out_dtype):
    cd = jnp.dtype(compute_dtype).itemsize
    od = jnp.dtype(out_dtype).itemsize
    rows = Bt * L8
    b = 2 * rows * C0 * cd                 # double-buffered x block
    b += 2 * rows * 4                      # double-buffered mask block
    b += 2 * rows * cfgs[-1]["cout"] * od  # double-buffered out block
    for c in cfgs:
        b += 2 * (c["k"] * c["cin"] * c["cout"] * cd + 3 * c["cout"] * 4)
        b += Bt * (2 * c["pad8"] + L8) * c["cin"] * cd          # pad scratch
        b += rows * (c["k"] * c["cin"] * cd + 2 * c["cout"] * 4)  # live temps
    # Floor 32 MiB; cap 56 MiB so the request is safe on v7x's 64 MiB VMEM.
    return int(min(max(2 * b + (8 << 20), 32 << 20), 56 << 20))


def cnn1d_forward(x_ncl, seq_mask_n1l, layers, *, batch_tile=None,
                  compute_dtype=jnp.bfloat16):
    """Fused Pallas forward.  x_ncl: (B, Cin, L); seq_mask: (B, 1, L) -> (B, Cout, L)."""
    B, C0, L = x_ncl.shape
    out_dtype = x_ncl.dtype

    x = jnp.transpose(x_ncl, (0, 2, 1))                # (B, L, Cin)
    mask = jnp.transpose(seq_mask_n1l, (0, 2, 1))      # (B, L, 1)

    # Keep L a multiple of 8 (sublane) so in-kernel (Bt,L,C) <-> (Bt*L,C)
    # reshapes are layout-trivial.  Padded rows carry mask=0, which makes the
    # math identical to conv zero-padding; they are sliced off below.
    L8 = _round_up(L, 8)
    if L8 != L:
        x = jnp.pad(x, ((0, 0), (0, L8 - L), (0, 0)))
        mask = jnp.pad(mask, ((0, 0), (0, L8 - L), (0, 0)))
    x = x.astype(compute_dtype)                        # halves input DMA (bf16)
    mask = mask.astype(jnp.float32)

    cfgs, params = [], []
    cin = C0
    for lay in layers:
        k, d = lay["k"], lay["d"]
        assert k % 2 == 1, "same-length Conv1d requires an odd kernel size"
        pad = (k - 1) // 2 * d
        pad8 = _round_up(pad, 8) if pad else 0
        cout = lay["w_kc"].shape[-1]
        cfgs.append(dict(k=k, d=d, pad=pad, pad8=pad8, cin=cin, cout=cout))
        params += [lay["w_kc"].astype(compute_dtype),  # pre-cast weight
                   lay["b2d"].astype(jnp.float32),
                   lay["scale2d"].astype(jnp.float32),
                   lay["shift2d"].astype(jnp.float32)]
        cin = cout
    Cout = cfgs[-1]["cout"]

    Bt = batch_tile if batch_tile is not None else _pick_batch_tile(B, L8)
    assert B % Bt == 0, (B, Bt)
    grid = (B // Bt,)

    in_specs = [
        pl.BlockSpec((Bt, L8, C0), lambda b: (b, 0, 0)),
        pl.BlockSpec((Bt * L8, 1), lambda b: (b, 0)),
    ]
    for cfg in cfgs:
        in_specs += [
            pl.BlockSpec((cfg["k"] * cfg["cin"], cfg["cout"]), lambda b: (0, 0)),
            pl.BlockSpec((1, cfg["cout"]), lambda b: (0, 0)),
            pl.BlockSpec((1, cfg["cout"]), lambda b: (0, 0)),
            pl.BlockSpec((1, cfg["cout"]), lambda b: (0, 0)),
        ]
    out_spec = pl.BlockSpec((Bt * L8, Cout), lambda b: (b, 0))
    scratch = [pltpu.VMEM((Bt, cfg["pad8"] + L8 + cfg["pad8"], cfg["cin"]),
                          compute_dtype) for cfg in cfgs]

    kern = functools.partial(_fused_cnn1d_kernel, cfgs=cfgs, Bt=Bt, L=L8)
    out_flat = pl.pallas_call(
        kern,
        out_shape=jax.ShapeDtypeStruct((B * L8, Cout), out_dtype),
        grid_spec=pltpu.PrefetchScalarGridSpec(
            num_scalar_prefetch=0,
            grid=grid,
            in_specs=in_specs,
            out_specs=out_spec,
            scratch_shapes=scratch,
        ),
        compiler_params=pltpu.CompilerParams(
            dimension_semantics=("parallel",),
            vmem_limit_bytes=_vmem_limit_bytes(Bt, L8, C0, cfgs,
                                               compute_dtype, out_dtype)),
    )(x, mask.reshape(B * L8, 1), *params)

    out = out_flat.reshape(B, L8, Cout)[:, :L, :]
    return jnp.transpose(out, (0, 2, 1))               # (B, Cout, L)


def cnn1d_reference(x_ncl, seq_mask_n1l, layers, compute_dtype=jnp.float32):
    """Pure-JAX reference (mirrors the PyTorch forward, eval-mode BN).

    compute_dtype quantizes the conv operands at exactly the points the Pallas
    kernel does (inputs/weights -> bf16, f32 accumulate + f32 epilogue), so the
    bf16 kernel path can be checked with a tight tolerance."""
    x = x_ncl
    for lay in layers:
        pad = (lay["k"] - 1) // 2 * lay["d"]
        lhs = x.astype(compute_dtype).astype(jnp.float32)
        rhs = lay["w_oik"].astype(compute_dtype).astype(jnp.float32)
        y = jax.lax.conv_general_dilated(
            lhs, rhs, window_strides=(1,), padding=[(pad, pad)],
            rhs_dilation=(lay["d"],),
            dimension_numbers=("NCH", "OIH", "NCH"))
        y = y + lay["b"][None, :, None]
        y = jnp.maximum(y, 0.0)
        y = y * lay["scale"][None, :, None] + lay["shift"][None, :, None]
        x = y * seq_mask_n1l
    return x


def make_params(key, input_dim, channel_dims, kernel_sizes, dilations):
    eps = 1e-5
    dims = [input_dim] + list(channel_dims)
    layers = []
    for m, n, k, d in zip(dims, dims[1:], kernel_sizes, dilations):
        key, k1, k2, k3, k4, k5, k6 = jax.random.split(key, 7)
        w_oik = jax.random.normal(k1, (n, m, k), jnp.float32) * 0.1  # (Cout,Cin,K)
        b = jax.random.normal(k2, (n,), jnp.float32) * 0.1
        gamma = 1.0 + 0.1 * jax.random.normal(k3, (n,), jnp.float32)
        beta = 0.1 * jax.random.normal(k4, (n,), jnp.float32)
        run_mean = 0.1 * jax.random.normal(k5, (n,), jnp.float32)
        run_var = jnp.abs(jax.random.normal(k6, (n,), jnp.float32)) + 0.5
        scale = gamma / jnp.sqrt(run_var + eps)
        shift = beta - run_mean * scale
        # (K, Cin, Cout) -> (K*Cin, Cout): row index t*Cin + c, matching both
        # the lane-concatenated im2col slab and the per-tap weight slices.
        w_kc = jnp.transpose(w_oik, (2, 1, 0)).reshape(k * m, n)
        layers.append({
            "w_oik": w_oik,                  # for the lax.conv reference
            "w_kc": w_kc,                    # (K*Cin, Cout) kernel weight
            "b": b,
            "b2d": b.reshape(1, n),
            "scale2d": scale.reshape(1, n),
            "shift2d": shift.reshape(1, n),
            "scale": scale,
            "shift": shift,
            "k": k,
            "d": d,
        })
    return layers


if __name__ == "__main__":
    def run_case(key, B, L, input_dim, channel_dims, kernel_sizes, dilations):
        key, kx, kl = jax.random.split(key, 3)
        x = jax.random.normal(kx, (B, input_dim, L), jnp.float32)  # PyTorch NCL
        lengths = jax.random.randint(kl, (B,), L // 2, L + 1)
        seq_mask = (jnp.arange(L)[None, :] < lengths[:, None]).astype(jnp.float32)
        seq_mask = seq_mask[:, None, :]                            # (B, 1, L)
        layers = make_params(key, input_dim, channel_dims, kernel_sizes,
                             dilations)

        # f32 compute path: tight check against the lax.conv reference.
        out32 = jax.block_until_ready(
            cnn1d_forward(x, seq_mask, layers, compute_dtype=jnp.float32))
        ref32 = cnn1d_reference(x, seq_mask, layers)
        assert out32.shape == (B, channel_dims[-1], L), out32.shape
        err32 = float(jnp.max(jnp.abs(out32 - ref32)))
        assert jnp.allclose(out32, ref32, atol=1e-3, rtol=1e-3), err32

        # Default bf16 compute path: check against a bf16-quantized reference
        # (same operand-cast points, f32 accumulate), so the tolerance only
        # has to absorb accumulation-order differences.
        out16 = jax.block_until_ready(cnn1d_forward(x, seq_mask, layers))
        assert out16.shape == (B, channel_dims[-1], L), out16.shape
        ref16 = cnn1d_reference(x, seq_mask, layers,
                                compute_dtype=jnp.bfloat16)
        err16 = float(jnp.max(jnp.abs(out16 - ref16)))
        assert jnp.allclose(out16, ref16, atol=1e-2, rtol=1e-2), err16

    key = jax.random.PRNGKey(0)
    k1, k2 = jax.random.split(key)
    # Small-channel config: exercises the im2col (lane-concat) path + dilation.
    run_case(k1, B=2, L=16, input_dim=32, channel_dims=[16, 32],
             kernel_sizes=[5, 5], dilations=[1, 2])
    # 128-multiple input channels: exercises the per-tap matmul-accumulate path.
    run_case(k2, B=4, L=16, input_dim=128, channel_dims=[128, 64],
             kernel_sizes=[3, 5], dilations=[2, 1])
    print("KERNEL_OK")
</pallas_src>

<mosaic_0001>
module attributes {stable_mosaic.version = 11 : i64} {
  func.func @_fused_cnn1d_kernel(%arg0: i32, %arg1: memref<1x16x32xf32, #tpu.memory_space<vmem>>, %arg2: memref<16x1xf32, #tpu.memory_space<vmem>>, %arg3: memref<160x16xf32, #tpu.memory_space<vmem>>, %arg4: memref<1x16xf32, #tpu.memory_space<vmem>>, %arg5: memref<1x16xf32, #tpu.memory_space<vmem>>, %arg6: memref<1x16xf32, #tpu.memory_space<vmem>>, %arg7: memref<80x32xf32, #tpu.memory_space<vmem>>, %arg8: memref<1x32xf32, #tpu.memory_space<vmem>>, %arg9: memref<1x32xf32, #tpu.memory_space<vmem>>, %arg10: memref<1x32xf32, #tpu.memory_space<vmem>>, %arg11: memref<16x32xf32, #tpu.memory_space<vmem>>, %arg12: memref<1x32x32xf32, #tpu.memory_space<vmem>>, %arg13: memref<1x32x16xf32, #tpu.memory_space<vmem>>) attributes {dimension_semantics = [#tpu.dimension_semantics<parallel>], iteration_bounds = array<i64: 2>, scalar_prefetch = 0 : i64, scratch_operands = 2 : i64, tpu.core_type = #tpu.core_type<tc>, window_params = [{transform_indices = @transform_0, window_bounds = array<i64: 1, 16, 32>}, {transform_indices = @transform_1, window_bounds = array<i64: 16, 1>}, {pipeline_mode = #tpu.pipeline_mode<synchronous>, transform_indices = @transform_2, window_bounds = array<i64: 160, 16>}, {pipeline_mode = #tpu.pipeline_mode<synchronous>, transform_indices = @transform_3, window_bounds = array<i64: 1, 16>}, {pipeline_mode = #tpu.pipeline_mode<synchronous>, transform_indices = @transform_4, window_bounds = array<i64: 1, 16>}, {pipeline_mode = #tpu.pipeline_mode<synchronous>, transform_indices = @transform_5, window_bounds = array<i64: 1, 16>}, {pipeline_mode = #tpu.pipeline_mode<synchronous>, transform_indices = @transform_6, window_bounds = array<i64: 80, 32>}, {pipeline_mode = #tpu.pipeline_mode<synchronous>, transform_indices = @transform_7, window_bounds = array<i64: 1, 32>}, {pipeline_mode = #tpu.pipeline_mode<synchronous>, transform_indices = @transform_8, window_bounds = array<i64: 1, 32>}, {pipeline_mode = #tpu.pipeline_mode<synchronous>, transform_indices = @transform_9, window_bounds = array<i64: 1, 32>}, {transform_indices = @transform_10, window_bounds = array<i64: 16, 32>}]} {
    %c0 = arith.constant 0 : index
    %c0_0 = arith.constant 0 : index
    %0 = vector.load %arg2[%c0, %c0_0] : memref<16x1xf32, #tpu.memory_space<vmem>>, vector<16x1xf32>
    %c0_1 = arith.constant 0 : index
    %c0_2 = arith.constant 0 : index
    %c0_3 = arith.constant 0 : index
    %1 = vector.load %arg1[%c0_1, %c0_2, %c0_3] : memref<1x16x32xf32, #tpu.memory_space<vmem>>, vector<1x16x32xf32>
    %cst = arith.constant 0.000000e+00 : f32
    %2 = vector.broadcast %cst : f32 to vector<1x8x32xf32>
    %c0_4 = arith.constant 0 : index
    %c0_5 = arith.constant 0 : index
    %c0_6 = arith.constant 0 : index
    %3 = vector.load %arg12[%c0_4, %c0_5, %c0_6] : memref<1x32x32xf32, #tpu.memory_space<vmem>>, vector<1x8x32xf32>
    tpu.vector_store %arg12[%c0_4, %c0_5, %c0_6], %2 {strides = array<i32>} : memref<1x32x32xf32, #tpu.memory_space<vmem>>, vector<1x8x32xf32>,
    %cst_7 = arith.constant 0.000000e+00 : f32
    %4 = vector.broadcast %cst_7 : f32 to vector<1x8x32xf32>
    %c0_8 = arith.constant 0 : index
    %c24 = arith.constant 24 : index
    %c0_9 = arith.constant 0 : index
    %5 = vector.load %arg12[%c0_8, %c24, %c0_9] : memref<1x32x32xf32, #tpu.memory_space<vmem>>, vector<1x8x32xf32>
    tpu.vector_store %arg12[%c0_8, %c24, %c0_9], %4 {strides = array<i32>} : memref<1x32x32xf32, #tpu.memory_space<vmem>>, vector<1x8x32xf32>,
    %c0_10 = arith.constant 0 : index
    %c8 = arith.constant 8 : index
    %c0_11 = arith.constant 0 : index
    %6 = vector.load %arg12[%c0_10, %c8, %c0_11] : memref<1x32x32xf32, #tpu.memory_space<vmem>>, vector<1x16x32xf32>
    tpu.vector_store %arg12[%c0_10, %c8, %c0_11], %1 {strides = array<i32>} : memref<1x32x32xf32, #tpu.memory_space<vmem>>, vector<1x16x32xf32>,
    %c0_12 = arith.constant 0 : index
    %c6 = arith.constant 6 : index
    %c0_13 = arith.constant 0 : index
    %7 = vector.load %arg12[%c0_12, %c6, %c0_13] : memref<1x32x32xf32, #tpu.memory_space<vmem>>, vector<1x16x32xf32>
    %8 = vector.shape_cast %7 : vector<1x16x32xf32> to vector<16x32xf32>
    %c0_14 = arith.constant 0 : index
    %c7 = arith.constant 7 : index
    %c0_15 = arith.constant 0 : index
    %9 = vector.load %arg12[%c0_14, %c7, %c0_15] : memref<1x32x32xf32, #tpu.memory_space<vmem>>, vector<1x16x32xf32>
    %10 = vector.shape_cast %9 : vector<1x16x32xf32> to vector<16x32xf32>
    %c0_16 = arith.constant 0 : index
    %c8_17 = arith.constant 8 : index
    %c0_18 = arith.constant 0 : index
    %11 = vector.load %arg12[%c0_16, %c8_17, %c0_18] : memref<1x32x32xf32, #tpu.memory_space<vmem>>, vector<1x16x32xf32>
    %12 = vector.shape_cast %11 : vector<1x16x32xf32> to vector<16x32xf32>
    %c0_19 = arith.constant 0 : index
    %c9 = arith.constant 9 : index
    %c0_20 = arith.constant 0 : index
    %13 = vector.load %arg12[%c0_19, %c9, %c0_20] : memref<1x32x32xf32, #tpu.memory_space<vmem>>, vector<1x16x32xf32>
    %14 = vector.shape_cast %13 : vector<1x16x32xf32> to vector<16x32xf32>
    %c0_21 = arith.constant 0 : index
    %c10 = arith.constant 10 : index
    %c0_22 = arith.constant 0 : index
    %15 = vector.load %arg12[%c0_21, %c10, %c0_22] : memref<1x32x32xf32, #tpu.memory_space<vmem>>, vector<1x16x32xf32>
    %16 = vector.shape_cast %15 : vector<1x16x32xf32> to vector<16x32xf32>
    %17 = tpu.concatenate %8, %10, %12, %14, %16 in 1 : vector<16x32xf32>, vector<16x32xf32>, vector<16x32xf32>, vector<16x32xf32>, vector<16x32xf32> -> vector<16x160xf32>
    %c0_23 = arith.constant 0 : index
    %c0_24 = arith.constant 0 : index
    %18 = vector.load %arg3[%c0_23, %c0_24] : memref<160x16xf32, #tpu.memory_space<vmem>>, vector<160x16xf32>
    %cst_25 = arith.constant dense<0.000000e+00> : vector<16x16xf32>
    %19 = tpu.matmul %17, %18, %cst_25 {dimension_numbers = #tpu.dot_dimension_numbers<[1], [0], [0], [1], [0, 0, 1, 1], [], []>} : vector<16x160xf32>, vector<160x16xf32>, vector<16x16xf32> -> vector<16x16xf32>
    %c0_26 = arith.constant 0 : index
    %c0_27 = arith.constant 0 : index
    %20 = vector.load %arg4[%c0_26, %c0_27] : memref<1x16xf32, #tpu.memory_space<vmem>>, vector<1x16xf32>
    %21 = vector.broadcast %20 : vector<1x16xf32> to vector<16x16xf32>
    %22 = arith.addf %19, %21 : vector<16x16xf32>
    %cst_28 = arith.constant 0.000000e+00 : f32
    %23 = vector.broadcast %cst_28 : f32 to vector<16x16xf32>
    %24 = arith.maximumf %22, %23 : vector<16x16xf32>
    %c0_29 = arith.constant 0 : index
    %c0_30 = arith.constant 0 : index
    %25 = vector.load %arg5[%c0_29, %c0_30] : memref<1x16xf32, #tpu.memory_space<vmem>>, vector<1x16xf32>
    %26 = vector.broadcast %25 : vector<1x16xf32> to vector<16x16xf32>
    %27 = arith.mulf %24, %26 : vector<16x16xf32>
    %c0_31 = arith.constant 0 : index
    %c0_32 = arith.constant 0 : index
    %28 = vector.load %arg6[%c0_31, %c0_32] : memref<1x16xf32, #tpu.memory_space<vmem>>, vector<1x16xf32>
    %29 = vector.broadcast %28 : vector<1x16xf32> to vector<16x16xf32>
    %30 = arith.addf %27, %29 : vector<16x16xf32>
    %31 = vector.broadcast %0 : vector<16x1xf32> to vector<16x16xf32>
    %32 = arith.mulf %30, %31 : vector<16x16xf32>
    %33 = vector.shape_cast %32 : vector<16x16xf32> to vector<1x16x16xf32>
    %cst_33 = arith.constant 0.000000e+00 : f32
    %34 = vector.broadcast %cst_33 : f32 to vector<1x8x16xf32>
    %c0_34 = arith.constant 0 : index
    %c0_35 = arith.constant 0 : index
    %c0_36 = arith.constant 0 : index
    %35 = vector.load %arg13[%c0_34, %c0_35, %c0_36] : memref<1x32x16xf32, #tpu.memory_space<vmem>>, vector<1x8x16xf32>
    tpu.vector_store %arg13[%c0_34, %c0_35, %c0_36], %34 {strides = array<i32>} : memref<1x32x16xf32, #tpu.memory_space<vmem>>, vector<1x8x16xf32>,
    %cst_37 = arith.constant 0.000000e+00 : f32
    %36 = vector.broadcast %cst_37 : f32 to vector<1x8x16xf32>
    %c0_38 = arith.constant 0 : index
    %c24_39 = arith.constant 24 : index
    %c0_40 = arith.constant 0 : index
    %37 = vector.load %arg13[%c0_38, %c24_39, %c0_40] : memref<1x32x16xf32, #tpu.memory_space<vmem>>, vector<1x8x16xf32>
    tpu.vector_store %arg13[%c0_38, %c24_39, %c0_40], %36 {strides = array<i32>} : memref<1x32x16xf32, #tpu.memory_space<vmem>>, vector<1x8x16xf32>,
    %c0_41 = arith.constant 0 : index
    %c8_42 = arith.constant 8 : index
    %c0_43 = arith.constant 0 : index
    %38 = vector.load %arg13[%c0_41, %c8_42, %c0_43] : memref<1x32x16xf32, #tpu.memory_space<vmem>>, vector<1x16x16xf32>
    tpu.vector_store %arg13[%c0_41, %c8_42, %c0_43], %33 {strides = array<i32>} : memref<1x32x16xf32, #tpu.memory_space<vmem>>, vector<1x16x16xf32>,
    %c0_44 = arith.constant 0 : index
    %c4 = arith.constant 4 : index
    %c0_45 = arith.constant 0 : index
    %39 = vector.load %arg13[%c0_44, %c4, %c0_45] : memref<1x32x16xf32, #tpu.memory_space<vmem>>, vector<1x16x16xf32>
    %40 = vector.shape_cast %39 : vector<1x16x16xf32> to vector<16x16xf32>
    %c0_46 = arith.constant 0 : index
    %c6_47 = arith.constant 6 : index
    %c0_48 = arith.constant 0 : index
    %41 = vector.load %arg13[%c0_46, %c6_47, %c0_48] : memref<1x32x16xf32, #tpu.memory_space<vmem>>, vector<1x16x16xf32>
    %42 = vector.shape_cast %41 : vector<1x16x16xf32> to vector<16x16xf32>
    %c0_49 = arith.constant 0 : index
    %c8_50 = arith.constant 8 : index
    %c0_51 = arith.constant 0 : index
    %43 = vector.load %arg13[%c0_49, %c8_50, %c0_51] : memref<1x32x16xf32, #tpu.memory_space<vmem>>, vector<1x16x16xf32>
    %44 = vector.shape_cast %43 : vector<1x16x16xf32> to vector<16x16xf32>
    %c0_52 = arith.constant 0 : index
    %c10_53 = arith.constant 10 : index
    %c0_54 = arith.constant 0 : index
    %45 = vector.load %arg13[%c0_52, %c10_53, %c0_54] : memref<1x32x16xf32, #tpu.memory_space<vmem>>, vector<1x16x16xf32>
    %46 = vector.shape_cast %45 : vector<1x16x16xf32> to vector<16x16xf32>
    %c0_55 = arith.constant 0 : index
    %c12 = arith.constant 12 : index
    %c0_56 = arith.constant 0 : index
    %47 = vector.load %arg13[%c0_55, %c12, %c0_56] : memref<1x32x16xf32, #tpu.memory_space<vmem>>, vector<1x16x16xf32>
    %48 = vector.shape_cast %47 : vector<1x16x16xf32> to vector<16x16xf32>
    %49 = tpu.concatenate %40, %42, %44, %46, %48 in 1 : vector<16x16xf32>, vector<16x16xf32>, vector<16x16xf32>, vector<16x16xf32>, vector<16x16xf32> -> vector<16x80xf32>
    %c0_57 = arith.constant 0 : index
    %c0_58 = arith.constant 0 : index
    %50 = vector.load %arg7[%c0_57, %c0_58] : memref<80x32xf32, #tpu.memory_space<vmem>>, vector<80x32xf32>
    %cst_59 = arith.constant dense<0.000000e+00> : vector<16x32xf32>
    %51 = tpu.matmul %49, %50, %cst_59 {dimension_numbers = #tpu.dot_dimension_numbers<[1], [0], [0], [1], [0, 0, 1, 1], [], []>} : vector<16x80xf32>, vector<80x32xf32>, vector<16x32xf32> -> vector<16x32xf32>
    %c0_60 = arith.constant 0 : index
    %c0_61 = arith.constant 0 : index
    %52 = vector.load %arg8[%c0_60, %c0_61] : memref<1x32xf32, #tpu.memory_space<vmem>>, vector<1x32xf32>
    %53 = vector.broadcast %52 : vector<1x32xf32> to vector<16x32xf32>
    %54 = arith.addf %51, %53 : vector<16x32xf32>
    %cst_62 = arith.constant 0.000000e+00 : f32
    %55 = vector.broadcast %cst_62 : f32 to vector<16x32xf32>
    %56 = arith.maximumf %54, %55 : vector<16x32xf32>
    %c0_63 = arith.constant 0 : index
    %c0_64 = arith.constant 0 : index
    %57 = vector.load %arg9[%c0_63, %c0_64] : memref<1x32xf32, #tpu.memory_space<vmem>>, vector<1x32xf32>
    %58 = vector.broadcast %57 : vector<1x32xf32> to vector<16x32xf32>
    %59 = arith.mulf %56, %58 : vector<16x32xf32>
    %c0_65 = arith.constant 0 : index
    %c0_66 = arith.constant 0 : index
    %60 = vector.load %arg10[%c0_65, %c0_66] : memref<1x32xf32, #tpu.memory_space<vmem>>, vector<1x32xf32>
    %61 = vector.broadcast %60 : vector<1x32xf32> to vector<16x32xf32>
    %62 = arith.addf %59, %61 : vector<16x32xf32>
    %63 = vector.broadcast %0 : vector<16x1xf32> to vector<16x32xf32>
    %64 = arith.mulf %62, %63 : vector<16x32xf32>
    %c0_67 = arith.constant 0 : index
    %c0_68 = arith.constant 0 : index
    %65 = vector.load %arg11[%c0_67, %c0_68] : memref<16x32xf32, #tpu.memory_space<vmem>>, vector<16x32xf32>
    tpu.vector_store %arg11[%c0_67, %c0_68], %64 {strides = array<i32>} : memref<16x32xf32, #tpu.memory_space<vmem>>, vector<16x32xf32>,
    return
  }
  func.func @transform_0(%arg0: i32) -> (i32, i32, i32) {
    %c0_i32 = arith.constant 0 : i32
    %c0_i32_0 = arith.constant 0 : i32
    %c0_i32_1 = arith.constant 0 : i32
    return %arg0, %c0_i32, %c0_i32_0 : i32, i32, i32
  }
  func.func @transform_1(%arg0: i32) -> (i32, i32) {
    %c0_i32 = arith.constant 0 : i32
    %c0_i32_0 = arith.constant 0 : i32
    return %arg0, %c0_i32 : i32, i32
  }
  func.func @transform_2(%arg0: i32) -> (i32, i32) {
    %c0_i32 = arith.constant 0 : i32
    %c0_i32_0 = arith.constant 0 : i32
    %c0_i32_1 = arith.constant 0 : i32
    return %c0_i32, %c0_i32_0 : i32, i32
  }
  func.func @transform_3(%arg0: i32) -> (i32, i32) {
    %c0_i32 = arith.constant 0 : i32
    %c0_i32_0 = arith.constant 0 : i32
    %c0_i32_1 = arith.constant 0 : i32
    return %c0_i32, %c0_i32_0 : i32, i32
  }
  func.func @transform_4(%arg0: i32) -> (i32, i32) {
    %c0_i32 = arith.constant 0 : i32
    %c0_i32_0 = arith.constant 0 : i32
    %c0_i32_1 = arith.constant 0 : i32
    return %c0_i32, %c0_i32_0 : i32, i32
  }
  func.func @transform_5(%arg0: i32) -> (i32, i32) {
    %c0_i32 = arith.constant 0 : i32
    %c0_i32_0 = arith.constant 0 : i32
    %c0_i32_1 = arith.constant 0 : i32
    return %c0_i32, %c0_i32_0 : i32, i32
  }
  func.func @transform_6(%arg0: i32) -> (i32, i32) {
    %c0_i32 = arith.constant 0 : i32
    %c0_i32_0 = arith.constant 0 : i32
    %c0_i32_1 = arith.constant 0 : i32
    return %c0_i32, %c0_i32_0 : i32, i32
  }
  func.func @transform_7(%arg0: i32) -> (i32, i32) {
    %c0_i32 = arith.constant 0 : i32
    %c0_i32_0 = arith.constant 0 : i32
    %c0_i32_1 = arith.constant 0 : i32
    return %c0_i32, %c0_i32_0 : i32, i32
  }
  func.func @transform_8(%arg0: i32) -> (i32, i32) {
    %c0_i32 = arith.constant 0 : i32
    %c0_i32_0 = arith.constant 0 : i32
    %c0_i32_1 = arith.constant 0 : i32
    return %c0_i32, %c0_i32_0 : i32, i32
  }
  func.func @transform_9(%arg0: i32) -> (i32, i32) {
    %c0_i32 = arith.constant 0 : i32
    %c0_i32_0 = arith.constant 0 : i32
    %c0_i32_1 = arith.constant 0 : i32
    return %c0_i32, %c0_i32_0 : i32, i32
  }
  func.func @transform_10(%arg0: i32) -> (i32, i32) {
    %c0_i32 = arith.constant 0 : i32
    %c0_i32_0 = arith.constant 0 : i32
    return %arg0, %c0_i32 : i32, i32
  }
}

</mosaic_0001>

<llo_original>
// kernel: tpu_custom_call.1
$region0: #{tpu_custom_call.1}
  #allocation0 [shape = 'u32[]', space=smem, size = 0x4, offset = 0x4, fixed_abs, tag = 'smem constant byte address 0x4 - core index']
  #allocation1 [shape = 'u32[72,128]{1,0:T(1,128)}', space=vmem, size = 0x9000, scoped, tag = 'internal scratch']
  #allocation2 [shape = 'f32[1,32,32]{2,1,0:T(8,128)}', space=vmem, size = 0x4000, scoped, tag = 'scratch operand']
  #allocation3 [shape = 'f32[1,32,16]{2,1,0:T(8,128)}', space=vmem, size = 0x4000, scoped, tag = 'scratch operand']
  %s0 = inlined_call_operand.vmem [shape: f32[2,16,32], index: 0, kind: input, shape index: {}]
  %s1 = inlined_call_operand.vmem [shape: f32[32,1], index: 1, kind: input, shape index: {}]
  %s2 = inlined_call_operand.vmem [shape: f32[160,16], index: 2, kind: input, shape index: {}]
  %s3 = inlined_call_operand.vmem [shape: f32[1,16], index: 3, kind: input, shape index: {}]
  %s4 = inlined_call_operand.vmem [shape: f32[1,16], index: 4, kind: input, shape index: {}]
  %s5 = inlined_call_operand.vmem [shape: f32[1,16], index: 5, kind: input, shape index: {}]
  %s6 = inlined_call_operand.vmem [shape: f32[80,32], index: 6, kind: input, shape index: {}]
  %s7 = inlined_call_operand.vmem [shape: f32[1,32], index: 7, kind: input, shape index: {}]
  %s8 = inlined_call_operand.vmem [shape: f32[1,32], index: 8, kind: input, shape index: {}]
  %s9 = inlined_call_operand.vmem [shape: f32[1,32], index: 9, kind: input, shape index: {}]
  %s10 = inlined_call_operand.hbm [shape: f32[32,32], index: 10, kind: output, shape index: {}]
  %s11 = sld [smem:[#allocation0]]
  $region73: #{tpu_custom_call.1} parent=0
    _
  %s13 = ssub.s32 1, %s11
  %s14 = scalar_select 0, %s13, %s11
  $region1: #{tpu_custom_call.1} parent=0
    #allocation4 [shape = 'u8[16384]{0}', space=vmem, size = 0x4000, scoped, tag = 'output window, operand 0']
    #allocation5 [shape = 's32[2]{0}', space=sflag, size = 0x8, scoped, tag = 'scoped memory for tpu_custom_call.1']
    %15 = vsyncpa [#allocation5], 0
    %s16 = scalar_lea.sflag [#allocation5], 1
    %17 = vsyncpa %s16, 0
    loop: start=0, step=1, limit=4
    $region2: #{tpu_custom_call.1} parent=1 // loop_pre_header
      _
    $region3: #{tpu_custom_call.1} parent=1 // loop_header
      %s19 = sphi 0, %s23
      %p20 = scmp.ge.s32.totalorder %s19, 4
      %s29 = sphi 0, %s31
      %s32 = sphi 0, %s29
      %s33 = sphi 0, %s32
      %s49 = sphi 0, %s33
      %s55 = sphi 0, %s57
      %s58 = sphi 0, %s55
      %s59 = sphi 0, %s58
      %s75 = sphi 0, %s59
      %s79 = sphi 0, %s79
      %s81 = sphi 0, %s79
      %s82 = sphi 0, %s81
      %s96 = sphi 0, %s82
      %s100 = sphi 0, %s100
      %s102 = sphi 0, %s100
      %s103 = sphi 0, %s102
      %s117 = sphi 0, %s103
      %s121 = sphi 0, %s121
      %s123 = sphi 0, %s121
      %s124 = sphi 0, %s123
      %s138 = sphi 0, %s124
      %s142 = sphi 0, %s142
      %s144 = sphi 0, %s142
      %s145 = sphi 0, %s144
      %s159 = sphi 0, %s145
      %s163 = sphi 0, %s163
      %s165 = sphi 0, %s163
      %s166 = sphi 0, %s165
      %s180 = sphi 0, %s166
      %s184 = sphi 0, %s184
      %s186 = sphi 0, %s184
      %s187 = sphi 0, %s186
      %s201 = sphi 0, %s187
      %s205 = sphi 0, %s205
      %s207 = sphi 0, %s205
      %s208 = sphi 0, %s207
      %s222 = sphi 0, %s208
      %s226 = sphi 0, %s226
      %s228 = sphi 0, %s226
      %s229 = sphi 0, %s228
      %s243 = sphi 0, %s229
      %s249 = sphi 0, %s251
      %s252 = sphi 0, %s249
      %s253 = sphi 0, %s252
      %s269 = sphi 0, %s253
    $region4: #{tpu_custom_call.1} parent=1 // loop_header_branch
      %22 = sbr.rel (%p20) target = $region8
    $region5: #{tpu_custom_call.1} parent=1 // loop_body
      %s24 = ssub.s32 %s19, 1
      %s25 = ssub.s32 %s19, 2
      %s26 = sadd.s32 %s19, 1
      %s27 = ssub.s32 %s19, %s26
      %p28 = scmp.eq.s32.totalorder %s27, 0
      %s30 = sadd.s32 %s29, 1
      %s31 = scalar_select %p28, %s29, %s30
      %p34 = pneg %p28
      %p35 = scmp.eq.s32.totalorder %s19, 1
      %p36 = por %p34, %p35
      %p37 = scmp.ne.s32.totalorder %s29, %s32
      %p38 = scmp.eq.s32.totalorder %s19, 0
      %p39 = por %p37, %p38
      %p40 = scmp.ne.s32.totalorder %s29, %s32
      %p41 = scmp.eq.s32.totalorder %s24, 1
      %p42 = por %p40, %p41
      %p43 = scmp.ne.s32.totalorder %s32, %s33
      %p44 = scmp.eq.s32.totalorder %s24, 0
      %p45 = por %p43, %p44
      %p46 = scmp.ne.s32.totalorder %s32, %s33
      %p47 = scmp.eq.s32.totalorder %s25, 1
      %p48 = por %p46, %p47
      %p50 = scmp.ne.s32.totalorder %s33, %s49
      %p51 = scmp.eq.s32.totalorder %s25, 0
      %p52 = por %p50, %p51
      %s53 = ssub.s32 %s19, %s26
      %p54 = scmp.eq.s32.totalorder %s53, 0
      %s56 = sadd.s32 %s55, 1
      %s57 = scalar_select %p54, %s55, %s56
      %p60 = pneg %p54
      %p61 = scmp.eq.s32.totalorder %s19, 1
      %p62 = por %p60, %p61
      %p63 = scmp.ne.s32.totalorder %s55, %s58
      %p64 = scmp.eq.s32.totalorder %s19, 0
      %p65 = por %p63, %p64
      %p66 = scmp.ne.s32.totalorder %s55, %s58
      %p67 = scmp.eq.s32.totalorder %s24, 1
      %p68 = por %p66, %p67
      %p69 = scmp.ne.s32.totalorder %s58, %s59
      %p70 = scmp.eq.s32.totalorder %s24, 0
      %p71 = por %p69, %p70
      %p72 = scmp.ne.s32.totalorder %s58, %s59
      %p73 = scmp.eq.s32.totalorder %s25, 1
      %p74 = por %p72, %p73
      %p76 = scmp.ne.s32.totalorder %s59, %s75
      %p77 = scmp.eq.s32.totalorder %s25, 0
      %p78 = por %p76, %p77
      %s80 = sadd.s32 %s79, 1
      %p83 = scmp.eq.s32.totalorder %s19, 1
      %p84 = scmp.ne.s32.totalorder %s79, %s81
      %p85 = scmp.eq.s32.totalorder %s19, 0
      %p86 = por %p84, %p85
      %p87 = scmp.ne.s32.totalorder %s79, %s81
      %p88 = scmp.eq.s32.totalorder %s24, 1
      %p89 = por %p87, %p88
      %p90 = scmp.ne.s32.totalorder %s81, %s82
      %p91 = scmp.eq.s32.totalorder %s24, 0
      %p92 = por %p90, %p91
      %p93 = scmp.ne.s32.totalorder %s81, %s82
      %p94 = scmp.eq.s32.totalorder %s25, 1
      %p95 = por %p93, %p94
      %p97 = scmp.ne.s32.totalorder %s82, %s96
      %p98 = scmp.eq.s32.totalorder %s25, 0
      %p99 = por %p97, %p98
      %s101 = sadd.s32 %s100, 1
      %p104 = scmp.eq.s32.totalorder %s19, 1
      %p105 = scmp.ne.s32.totalorder %s100, %s102
      %p106 = scmp.eq.s32.totalorder %s19, 0
      %p107 = por %p105, %p106
      %p108 = scmp.ne.s32.totalorder %s100, %s102
      %p109 = scmp.eq.s32.totalorder %s24, 1
      %p110 = por %p108, %p109
      %p111 = scmp.ne.s32.totalorder %s102, %s103
      %p112 = scmp.eq.s32.totalorder %s24, 0
      %p113 = por %p111, %p112
      %p114 = scmp.ne.s32.totalorder %s102, %s103
      %p115 = scmp.eq.s32.totalorder %s25, 1
      %p116 = por %p114, %p115
      %p118 = scmp.ne.s32.totalorder %s103, %s117
      %p119 = scmp.eq.s32.totalorder %s25, 0
      %p120 = por %p118, %p119
      %s122 = sadd.s32 %s121, 1
      %p125 = scmp.eq.s32.totalorder %s19, 1
      %p126 = scmp.ne.s32.totalorder %s121, %s123
      %p127 = scmp.eq.s32.totalorder %s19, 0
      %p128 = por %p126, %p127
      %p129 = scmp.ne.s32.totalorder %s121, %s123
      %p130 = scmp.eq.s32.totalorder %s24, 1
      %p131 = por %p129, %p130
      %p132 = scmp.ne.s32.totalorder %s123, %s124
      %p133 = scmp.eq.s32.totalorder %s24, 0
      %p134 = por %p132, %p133
      %p135 = scmp.ne.s32.totalorder %s123, %s124
      %p136 = scmp.eq.s32.totalorder %s25, 1
      %p137 = por %p135, %p136
      %p139 = scmp.ne.s32.totalorder %s124, %s138
      %p140 = scmp.eq.s32.totalorder %s25, 0
      %p141 = por %p139, %p140
      %s143 = sadd.s32 %s142, 1
      %p146 = scmp.eq.s32.totalorder %s19, 1
      %p147 = scmp.ne.s32.totalorder %s142, %s144
      %p148 = scmp.eq.s32.totalorder %s19, 0
      %p149 = por %p147, %p148
      %p150 = scmp.ne.s32.totalorder %s142, %s144
      %p151 = scmp.eq.s32.totalorder %s24, 1
      %p152 = por %p150, %p151
      %p153 = scmp.ne.s32.totalorder %s144, %s145
      %p154 = scmp.eq.s32.totalorder %s24, 0
      %p155 = por %p153, %p154
      %p156 = scmp.ne.s32.totalorder %s144, %s145
      %p157 = scmp.eq.s32.totalorder %s25, 1
      %p158 = por %p156, %p157
      %p160 = scmp.ne.s32.totalorder %s145, %s159
      %p161 = scmp.eq.s32.totalorder %s25, 0
      %p162 = por %p160, %p161
      %s164 = sadd.s32 %s163, 1
      %p167 = scmp.eq.s32.totalorder %s19, 1
      %p168 = scmp.ne.s32.totalorder %s163, %s165
      %p169 = scmp.eq.s32.totalorder %s19, 0
      %p170 = por %p168, %p169
      %p171 = scmp.ne.s32.totalorder %s163, %s165
      %p172 = scmp.eq.s32.totalorder %s24, 1
      %p173 = por %p171, %p172
      %p174 = scmp.ne.s32.totalorder %s165, %s166
      %p175 = scmp.eq.s32.totalorder %s24, 0
      %p176 = por %p174, %p175
      %p177 = scmp.ne.s32.totalorder %s165, %s166
      %p178 = scmp.eq.s32.totalorder %s25, 1
      %p179 = por %p177, %p178
      %p181 = scmp.ne.s32.totalorder %s166, %s180
      %p182 = scmp.eq.s32.totalorder %s25, 0
      %p183 = por %p181, %p182
      %s185 = sadd.s32 %s184, 1
      %p188 = scmp.eq.s32.totalorder %s19, 1
      %p189 = scmp.ne.s32.totalorder %s184, %s186
      %p190 = scmp.eq.s32.totalorder %s19, 0
      %p191 = por %p189, %p190
      %p192 = scmp.ne.s32.totalorder %s184, %s186
      %p193 = scmp.eq.s32.totalorder %s24, 1
      %p194 = por %p192, %p193
      %p195 = scmp.ne.s32.totalorder %s186, %s187
      %p196 = scmp.eq.s32.totalorder %s24, 0
      %p197 = por %p195, %p196
      %p198 = scmp.ne.s32.totalorder %s186, %s187
      %p199 = scmp.eq.s32.totalorder %s25, 1
      %p200 = por %p198, %p199
      %p202 = scmp.ne.s32.totalorder %s187, %s201
      %p203 = scmp.eq.s32.totalorder %s25, 0
      %p204 = por %p202, %p203
      %s206 = sadd.s32 %s205, 1
      %p209 = scmp.eq.s32.totalorder %s19, 1
      %p210 = scmp.ne.s32.totalorder %s205, %s207
      %p211 = scmp.eq.s32.totalorder %s19, 0
      %p212 = por %p210, %p211
      %p213 = scmp.ne.s32.totalorder %s205, %s207
      %p214 = scmp.eq.s32.totalorder %s24, 1
      %p215 = por %p213, %p214
      %p216 = scmp.ne.s32.totalorder %s207, %s208
      %p217 = scmp.eq.s32.totalorder %s24, 0
      %p218 = por %p216, %p217
      %p219 = scmp.ne.s32.totalorder %s207, %s208
      %p220 = scmp.eq.s32.totalorder %s25, 1
      %p221 = por %p219, %p220
      %p223 = scmp.ne.s32.totalorder %s208, %s222
      %p224 = scmp.eq.s32.totalorder %s25, 0
      %p225 = por %p223, %p224
      %s227 = sadd.s32 %s226, 1
      %p230 = scmp.eq.s32.totalorder %s19, 1
      %p231 = scmp.ne.s32.totalorder %s226, %s228
      %p232 = scmp.eq.s32.totalorder %s19, 0
      %p233 = por %p231, %p232
      %p234 = scmp.ne.s32.totalorder %s226, %s228
      %p235 = scmp.eq.s32.totalorder %s24, 1
      %p236 = por %p234, %p235
      %p237 = scmp.ne.s32.totalorder %s228, %s229
      %p238 = scmp.eq.s32.totalorder %s24, 0
      %p239 = por %p237, %p238
      %p240 = scmp.ne.s32.totalorder %s228, %s229
      %p241 = scmp.eq.s32.totalorder %s25, 1
      %p242 = por %p240, %p241
      %p244 = scmp.ne.s32.totalorder %s229, %s243
      %p245 = scmp.eq.s32.totalorder %s25, 0
      %p246 = por %p244, %p245
      %s247 = ssub.s32 %s19, %s26
      %p248 = scmp.eq.s32.totalorder %s247, 0
      %s250 = sadd.s32 %s249, 1
      %s251 = scalar_select %p248, %s249, %s250
      %p254 = pneg %p248
      %p255 = scmp.eq.s32.totalorder %s19, 1
      %p256 = por %p254, %p255
      %p257 = scmp.ne.s32.totalorder %s249, %s252
      %p258 = scmp.eq.s32.totalorder %s19, 0
      %p259 = por %p257, %p258
      %p260 = scmp.ne.s32.totalorder %s249, %s252
      %p261 = scmp.eq.s32.totalorder %s24, 1
      %p262 = por %p260, %p261
      %p263 = scmp.ne.s32.totalorder %s252, %s253
      %p264 = scmp.eq.s32.totalorder %s24, 0
      %p265 = por %p263, %p264
      %p266 = scmp.ne.s32.totalorder %s252, %s253
      %p267 = scmp.eq.s32.totalorder %s25, 1
      %p268 = por %p266, %p267
      %p270 = scmp.ne.s32.totalorder %s253, %s269
      %p271 = scmp.eq.s32.totalorder %s25, 0
      %p272 = por %p270, %p271
      %p273 = scmp.le.s32.totalorder 1, %s19
      %p274 = scmp.lt.s32.totalorder %s19, 3
      %p275 = pnand %p273, %p274
      %p276 = pneg %p275
      // Predicated region
      $region9: #{tpu_custom_call.1} parent=5 // pred_check
        _
      $region10: #{tpu_custom_call.1} parent=5 // pred_check_branch
        %278 = sbr.rel (%p275) target = $region12
      $region11: #{tpu_custom_call.1} parent=5 // pred_region
        %s279 = ssub.s32 %s19, 1
        // Predicated region
        $region13: #{tpu_custom_call.1} parent=11 // pred_check
          %p280 = pneg %p92
        $region14: #{tpu_custom_call.1} parent=11 // pred_check_branch
          %282 = sbr.rel (%p280) target = $region16
        $region15: #{tpu_custom_call.1} parent=11 // pred_region
          _
        $region16: #{tpu_custom_call.1} parent=11 // pred_fallthru
          _
        // Predicated region
        $region17: #{tpu_custom_call.1} parent=11 // pred_check
          %p283 = pneg %p113
        $region18: #{tpu_custom_call.1} parent=11 // pred_check_branch
          %285 = sbr.rel (%p283) target = $region20
        $region19: #{tpu_custom_call.1} parent=11 // pred_region
          _
        $region20: #{tpu_custom_call.1} parent=11 // pred_fallthru
          _
        // Predicated region
        $region21: #{tpu_custom_call.1} parent=11 // pred_check
          %p286 = pneg %p134
        $region22: #{tpu_custom_call.1} parent=11 // pred_check_branch
          %288 = sbr.rel (%p286) target = $region24
        $region23: #{tpu_custom_call.1} parent=11 // pred_region
          _
        $region24: #{tpu_custom_call.1} parent=11 // pred_fallthru
          _
        // Predicated region
        $region25: #{tpu_custom_call.1} parent=11 // pred_check
          %p289 = pneg %p155
        $region26: #{tpu_custom_call.1} parent=11 // pred_check_branch
          %291 = sbr.rel (%p289) target = $region28
        $region27: #{tpu_custom_call.1} parent=11 // pred_region
          _
        $region28: #{tpu_custom_call.1} parent=11 // pred_fallthru
          _
        // Predicated region
        $region29: #{tpu_custom_call.1} parent=11 // pred_check
          %p292 = pneg %p176
        $region30: #{tpu_custom_call.1} parent=11 // pred_check_branch
          %294 = sbr.rel (%p292) target = $region32
        $region31: #{tpu_custom_call.1} parent=11 // pred_region
          _
        $region32: #{tpu_custom_call.1} parent=11 // pred_fallthru
          _
        // Predicated region
        $region33: #{tpu_custom_call.1} parent=11 // pred_check
          %p295 = pneg %p197
        $region34: #{tpu_custom_call.1} parent=11 // pred_check_branch
          %297 = sbr.rel (%p295) target = $region36
        $region35: #{tpu_custom_call.1} parent=11 // pred_region
          _
        $region36: #{tpu_custom_call.1} parent=11 // pred_fallthru
          _
        // Predicated region
        $region37: #{tpu_custom_call.1} parent=11 // pred_check
          %p298 = pneg %p218
        $region38: #{tpu_custom_call.1} parent=11 // pred_check_branch
          %300 = sbr.rel (%p298) target = $region40
        $region39: #{tpu_custom_call.1} parent=11 // pred_region
          _
        $region40: #{tpu_custom_call.1} parent=11 // pred_fallthru
          _
        // Predicated region
        $region41: #{tpu_custom_call.1} parent=11 // pred_check
          %p301 = pneg %p239
        $region42: #{tpu_custom_call.1} parent=11 // pred_check_branch
          %303 = sbr.rel (%p301) target = $region44
        $region43: #{tpu_custom_call.1} parent=11 // pred_region
          _
        $region44: #{tpu_custom_call.1} parent=11 // pred_fallthru
          _
      $region12: #{tpu_custom_call.1} parent=5 // pred_fallthru
        _
      %p304 = scmp.lt.s32.totalorder %s19, 2
      // Predicated region
      $region45: #{tpu_custom_call.1} parent=5 // pred_check
        %p305 = pneg %p304
      $region46: #{tpu_custom_call.1} parent=5 // pred_check_branch
        %307 = sbr.rel (%p305) target = $region48
      $region47: #{tpu_custom_call.1} parent=5 // pred_region
        // Predicated region
        $region49: #{tpu_custom_call.1} parent=47 // pred_check
          %p308 = pneg %p39
        $region50: #{tpu_custom_call.1} parent=47 // pred_check_branch
          %310 = sbr.rel (%p308) target = $region52
        $region51: #{tpu_custom_call.1} parent=47 // pred_region
          %p311 = scmp.lt.s32.totalorder %s19, 1
          %s312 = scalar_select %p311, %s19, 1
          %s313 = smul.addr %s312, 2
          %s314 = smul.addr %s313, 8
          %s315 = scalar_lea.vmem %s0, %s314
        $region52: #{tpu_custom_call.1} parent=47 // pred_fallthru
          _
        // Predicated region
        $region53: #{tpu_custom_call.1} parent=47 // pred_check
          %p316 = pneg %p65
        $region54: #{tpu_custom_call.1} parent=47 // pred_check_branch
          %318 = sbr.rel (%p316) target = $region56
        $region55: #{tpu_custom_call.1} parent=47 // pred_region
          %s319 = smul.u32 2, %s19
          %p320 = scmp.lt.s32.totalorder %s319, 3
          %s321 = scalar_select %p320, %s319, 3
          %s322 = smul.addr %s321, 8
          %s323 = scalar_lea.vmem %s1, %s322
          %s324 = smul.u32 2, %s19
        $region56: #{tpu_custom_call.1} parent=47 // pred_fallthru
          _
      $region48: #{tpu_custom_call.1} parent=5 // pred_fallthru
        _
      %p325 = scmp.le.s32.totalorder 1, %s19
      %p326 = scmp.lt.s32.totalorder %s19, 3
      %p327 = pnand %p325, %p326
      %p328 = pneg %p327
      // Predicated region
      $region57: #{tpu_custom_call.1} parent=5 // pred_check
        _
      $region58: #{tpu_custom_call.1} parent=5 // pred_check_branch
        %330 = sbr.rel (%p327) target = $region60
      $region59: #{tpu_custom_call.1} parent=5 // pred_region
        %s331 = ssub.s32 %s19, 1
        %p332 = scmp.lt.s32.totalorder %s24, 1
        %s333 = scalar_select %p332, %s24, 1
        %s334 = smul.addr %s333, 2
        %s335 = smul.addr %s334, 8
        %s336 = scalar_lea.vmem %s0, %s335
        %p337 = pneg %p45
        %p338 = pneg %p42
        %s339 = smul.u32 2, %s24
        %p340 = scmp.lt.s32.totalorder %s339, 3
        %s341 = scalar_select %p340, %s339, 3
        %s342 = smul.addr %s341, 8
        %s343 = scalar_lea.vmem %s1, %s342
        %p344 = pneg %p71
        %p345 = pneg %p68
        %p346 = pneg %p92
        %p347 = pneg %p89
        %p348 = pneg %p113
        %p349 = pneg %p110
        %p350 = pneg %p134
        %p351 = pneg %p131
        %p352 = pneg %p155
        %p353 = pneg %p152
        %p354 = pneg %p176
        %p355 = pneg %p173
        %p356 = pneg %p197
        %p357 = pneg %p194
        %p358 = pneg %p218
        %p359 = pneg %p215
        %p360 = pneg %p239
        %p361 = pneg %p236
        %p362 = pneg %p265
        %p363 = pneg %p262
        %s364 = sand.u32 %s252, 1
        %s365 = scalar_lea.sflag [#allocation5], %s364
        %s366 = sand.u32 %s252, 1
        %s367 = smul.addr %s366, 16
        %s368 = scalar_lea.vmem [#allocation4], %s367
        %p369 = scmp.lt.s32.totalorder %s24, 1
        %s370 = scalar_select %p369, %s24, 1
        %s371 = smul.addr %s370, 2
        %s372 = smul.addr %s371, 8
        %s373 = scalar_lea.vmem %s0, %s372
        %s374 = smul.u32 2, %s24
        %p375 = scmp.lt.s32.totalorder %s374, 3
        %s376 = scalar_select %p375, %s374, 3
        %s377 = smul.addr %s376, 8
        %s378 = scalar_lea.vmem %s1, %s377
        %s379 = smul.u32 2, %s24
        %s380 = smul.u32 2, %s24
        %v381 = vld [vmem:[%s378] sm:$0xff]
        %v382 = vld [vmem:[%s378 + $0x8] sm:$0xff]
        %v383 = vld [vmem:[%s373] sm:$0xff]
        %v384 = vld [vmem:[%s373 + $0x8] sm:$0xff]
        %vm385 = vcmask 261120
        %386 = vst.msk [vmem:[#allocation2] sm:$0xff] %vm385, 0.0
        %387 = vst.msk [vmem:[#allocation2 + $0x18] sm:$0xff] %vm385, 0.0
        %388 = vst.msk [vmem:[#allocation2 + $0x8] sm:$0xff] %vm385, %v383
        %389 = vst.msk [vmem:[#allocation2 + $0x10] sm:$0xff] %vm385, %v384
        %v390 = vld [vmem:[#allocation2 + $0x6] sm:$0xff]
        %v391 = vld [vmem:[#allocation2 + $0xe] sm:$0xff]
        %v392 = vld [vmem:[#allocation2 + $0x7] sm:$0xff]
        %v393 = vld [vmem:[#allocation2 + $0xf] sm:$0xff]
        %v394 = vld [vmem:[#allocation2 + $0x8] sm:$0xff]
        %v395 = vld [vmem:[#allocation2 + $0x10] sm:$0xff]
        %v396 = vld [vmem:[#allocation2 + $0x9] sm:$0xff]
        %v397 = vld [vmem:[#allocation2 + $0x11] sm:$0xff]
        %v398 = vld [vmem:[#allocation2 + $0xa] sm:$0xff]
        %v399 = vld [vmem:[#allocation2 + $0x12] sm:$0xff]
        %402 = vrot.lane.b32.xlu0 %v392, 32
        %v403 = vpop.permute.xlu0 %402
        %404 = vrot.lane.b32.xlu0 %v393, 32
        %v405 = vpop.permute.xlu0 %404
        %410 = vrot.lane.b32.xlu0 %v394, 64
        %v411 = vpop.permute.xlu0 %410
        %412 = vrot.lane.b32.xlu0 %v395, 64
        %v413 = vpop.permute.xlu0 %412
        %418 = vrot.lane.b32.xlu0 %v396, 96
        %v419 = vpop.permute.xlu0 %418
        %420 = vrot.lane.b32.xlu0 %v397, 96
        %v421 = vpop.permute.xlu0 %420
        %v424 = vsel %vm385, %v390, %v403
        %v425 = vsel %vm385, %v391, %v405
        %vm426 = vcmask 523264
        %v427 = vsel %vm426, %v424, %v411
        %v428 = vsel %vm426, %v425, %v413
        %vm429 = vcmask 785408
        %v430 = vsel %vm429, %v427, %v419
        %v431 = vsel %vm429, %v428, %v421
        %v432 = vld [vmem:[%s2] sm:$0xff]
        %v433 = vld [vmem:[%s2 + $0x8] sm:$0xff]
        %v434 = vld [vmem:[%s2 + $0x10] sm:$0xff]
        %v435 = vld [vmem:[%s2 + $0x18] sm:$0xff]
        %v436 = vld [vmem:[%s2 + $0x20] sm:$0xff]
        %v437 = vld [vmem:[%s2 + $0x28] sm:$0xff]
        %v438 = vld [vmem:[%s2 + $0x30] sm:$0xff]
        %v439 = vld [vmem:[%s2 + $0x38] sm:$0xff]
        %v440 = vld [vmem:[%s2 + $0x40] sm:$0xff]
        %v441 = vld [vmem:[%s2 + $0x48] sm:$0xff]
        %v442 = vld [vmem:[%s2 + $0x50] sm:$0xff]
        %v443 = vld [vmem:[%s2 + $0x58] sm:$0xff]
        %v444 = vld [vmem:[%s2 + $0x60] sm:$0xff]
        %v445 = vld [vmem:[%s2 + $0x68] sm:$0xff]
        %v446 = vld [vmem:[%s2 + $0x70] sm:$0xff]
        %v447 = vld [vmem:[%s2 + $0x78] sm:$0xff]
        %v448 = vld [vmem:[%s2 + $0x80] sm:$0xff]
        %v449 = vld [vmem:[%s2 + $0x88] sm:$0xff]
        %v450 = vld [vmem:[%s2 + $0x90] sm:$0xff]
        %v451 = vld [vmem:[%s2 + $0x98] sm:$0xff]
        %v452 = vld [vmem:[%s3] sm:$0x1]
        %v454 = vperm.slane %v452, 0
        %v457 = vsel %vm385, %v398, 0
        %v460 = vsel %vm385, %v399, 0
        %462 = vmatpush.msra.mxu0 %v447
        %463 = vmatpush.msra.mxu0 %v446
        %464 = vmatpush.msra.mxu0 %v445
        %465 = vmatpush.msra.mxu0 %v444
        %466 = vmatpush.msra.mxu0 %v443
        %467 = vmatpush.msra.mxu0 %v442
        %468 = vmatpush.msra.mxu0 %v441
        %469 = vmatpush.msra.mxu0 %v440
        %470 = vmatpush.msra.mxu0 %v439
        %471 = vmatpush.msra.mxu0 %v438
        %472 = vmatpush.msra.mxu0 %v437
        %473 = vmatpush.msra.mxu0 %v436
        %474 = vmatpush.msra.mxu0 %v435
        %475 = vmatpush.msra.mxu0 %v434
        %476 = vmatpush.msra.mxu0 %v433
        %477 = vmatpush.msra.mxu0 %v432
        %478 = vmatmul.f32.gmra.mxu0 %v430
        %v479 = vpop.f32.mrf.mxu0
        %v480 = vadd.f32 %v454, %v479
        %481 = vmatmul.f32.gmra.mxu0 %v431
        %v482 = vpop.f32.mrf.mxu0
        %v483 = vadd.f32 %v454, %v482
        %484 = vdwg.mxu0
        %485 = vmatpush.msra.mxu0 0.0
        %486 = vmatpush.msra.mxu0 0.0
        %487 = vmatpush.msra.mxu0 0.0
        %488 = vmatpush.msra.mxu0 0.0
        %489 = vmatpush.msra.mxu0 0.0
        %490 = vmatpush.msra.mxu0 0.0
        %491 = vmatpush.msra.mxu0 0.0
        %492 = vmatpush.msra.mxu0 0.0
        %493 = vmatpush.msra.mxu0 0.0
        %494 = vmatpush.msra.mxu0 0.0
        %495 = vmatpush.msra.mxu0 0.0
        %496 = vmatpush.msra.mxu0 0.0
        %497 = vmatpush.msra.mxu0 %v451
        %498 = vmatpush.msra.mxu0 %v450
        %499 = vmatpush.msra.mxu0 %v449
        %500 = vmatpush.msra.mxu0 %v448
        %501 = vmatmul.f32.gmra.mxu0 %v457
        %v502 = vpop.f32.mrf.mxu0
        %v503 = vadd.f32 %v480, %v502
        %504 = vmatmul.f32.gmra.mxu0 %v460
        %v505 = vpop.f32.mrf.mxu0
        %v506 = vadd.f32 %v483, %v505
        %507 = vdwg.mxu0
        %v508 = vmax.f32 %v503, 0.0
        %v509 = vmax.f32 %v506, 0.0
        %v510 = vld [vmem:[%s4] sm:$0x1]
        %v512 = vperm.slane %v510, 0
        %v514 = vmul.f32 %v508, %v512
        %v515 = vmul.f32 %v509, %v512
        %v516 = vld [vmem:[%s5] sm:$0x1]
        %v518 = vperm.slane %v516, 0
        %v520 = vadd.f32 %v514, %v518
        %v521 = vadd.f32 %v515, %v518
        %523 = vset.pattern.permute.xlu0 0
        %524 = vperm.xlu0 %523, %v381
        %v525 = vpop.permute.xlu0 %524
        %528 = vset.pattern.permute.xlu0 0
        %529 = vperm.xlu0 %528, %v382
        %v530 = vpop.permute.xlu0 %529
        %v532 = vmul.f32 %v520, %v525
        %v533 = vmul.f32 %v521, %v530
        %vm534 = vcmask 130048
        %535 = vst.msk [vmem:[#allocation3] sm:$0xff] %vm534, 0.0
        %536 = vst.msk [vmem:[#allocation3 + $0x18] sm:$0xff] %vm534, 0.0
        %537 = vst.msk [vmem:[#allocation3 + $0x8] sm:$0xff] %vm534, %v532
        %538 = vst.msk [vmem:[#allocation3 + $0x10] sm:$0xff] %vm534, %v533
        %v539 = vld [vmem:[#allocation3 + $0x4] sm:$0xff]
        %v540 = vld [vmem:[#allocation3 + $0xc] sm:$0xff]
        %v541 = vld [vmem:[#allocation3 + $0x6] sm:$0xff]
        %v542 = vld [vmem:[#allocation3 + $0xe] sm:$0xff]
        %v543 = vld [vmem:[#allocation3 + $0x8] sm:$0xff]
        %v544 = vld [vmem:[#allocation3 + $0x10] sm:$0xff]
        %v545 = vld [vmem:[#allocation3 + $0xa] sm:$0xff]
        %v546 = vld [vmem:[#allocation3 + $0x12] sm:$0xff]
        %v547 = vld [vmem:[#allocation3 + $0x14] sm:$0xff]
        %550 = vrot.lane.b32.xlu0 %v541, 16
        %v551 = vpop.permute.xlu0 %550
        %552 = vrot.lane.b32.xlu0 %v542, 16
        %v553 = vpop.permute.xlu0 %552
        %558 = vrot.lane.b32.xlu0 %v543, 32
        %v559 = vpop.permute.xlu0 %558
        %560 = vrot.lane.b32.xlu0 %v544, 32
        %v561 = vpop.permute.xlu0 %560
        %566 = vrot.lane.b32.xlu0 %v545, 48
        %v567 = vpop.permute.xlu0 %566
        %568 = vrot.lane.b32.xlu0 %v546, 48
        %v569 = vpop.permute.xlu0 %568
        %574 = vrot.lane.b32.xlu0 %v540, 64
        %v575 = vpop.permute.xlu0 %574
        %576 = vrot.lane.b32.xlu0 %v547, 64
        %v577 = vpop.permute.xlu0 %576
        %v580 = vsel %vm534, %v539, %v551
        %v581 = vsel %vm534, %v540, %v553
        %v582 = vsel %vm385, %v580, %v559
        %v583 = vsel %vm385, %v581, %v561
        %vm584 = vcmask 392192
        %v585 = vsel %vm584, %v582, %v567
        %v586 = vsel %vm584, %v583, %v569
        %v587 = vsel %vm426, %v585, %v575
        %v588 = vsel %vm426, %v586, %v577
        %v589 = vld [vmem:[%s6] sm:$0xff]
        %v590 = vld [vmem:[%s6 + $0x8] sm:$0xff]
        %v591 = vld [vmem:[%s6 + $0x10] sm:$0xff]
        %v592 = vld [vmem:[%s6 + $0x18] sm:$0xff]
        %v593 = vld [vmem:[%s6 + $0x20] sm:$0xff]
        %v594 = vld [vmem:[%s6 + $0x28] sm:$0xff]
        %v595 = vld [vmem:[%s6 + $0x30] sm:$0xff]
        %v596 = vld [vmem:[%s6 + $0x38] sm:$0xff]
        %v597 = vld [vmem:[%s6 + $0x40] sm:$0xff]
        %v598 = vld [vmem:[%s6 + $0x48] sm:$0xff]
        %v599 = vld [vmem:[%s7] sm:$0x1]
        %v601 = vperm.slane %v599, 0
        %vm603 = vcmask 654336
        %v605 = vsel %vm603, %v587, 0
        %v608 = vsel %vm603, %v588, 0
        %610 = vmatpush.msra.mxu0 0.0
        %611 = vmatpush.msra.mxu0 0.0
        %612 = vmatpush.msra.mxu0 0.0
        %613 = vmatpush.msra.mxu0 0.0
        %614 = vmatpush.msra.mxu0 0.0
        %615 = vmatpush.msra.mxu0 0.0
        %616 = vmatpush.msra.mxu0 %v598
        %617 = vmatpush.msra.mxu0 %v597
        %618 = vmatpush.msra.mxu0 %v596
        %619 = vmatpush.msra.mxu0 %v595
        %620 = vmatpush.msra.mxu0 %v594
        %621 = vmatpush.msra.mxu0 %v593
        %622 = vmatpush.msra.mxu0 %v592
        %623 = vmatpush.msra.mxu0 %v591
        %624 = vmatpush.msra.mxu0 %v590
        %625 = vmatpush.msra.mxu0 %v589
        %626 = vmatmul.f32.gmra.mxu0 %v605
        %v627 = vpop.f32.mrf.mxu0
        %v628 = vadd.f32 %v601, %v627
        %629 = vmatmul.f32.gmra.mxu0 %v608
        %v630 = vpop.f32.mrf.mxu0
        %v631 = vadd.f32 %v601, %v630
        %632 = vdwg.mxu0
        %v633 = vmax.f32 %v628, 0.0
        %v634 = vmax.f32 %v631, 0.0
        %v635 = vld [vmem:[%s8] sm:$0x1]
        %v637 = vperm.slane %v635, 0
        %v639 = vmul.f32 %v633, %v637
        %v640 = vmul.f32 %v634, %v637
        %v641 = vld [vmem:[%s9] sm:$0x1]
        %v643 = vperm.slane %v641, 0
        %v645 = vadd.f32 %v639, %v643
        %v646 = vadd.f32 %v640, %v643
        %v647 = vmul.f32 %v645, %v525
        %v648 = vmul.f32 %v646, %v530
        %649 = vst.msk [vmem:[%s368] sm:$0xff] %vm385, %v647
        %650 = vst.msk [vmem:[%s368 + $0x8] sm:$0xff] %vm385, %v648
        %s651 = sand.u32 %s252, 1
        %s652 = scalar_lea.sflag [#allocation5], %s651
        %s653 = sand.u32 %s252, 1
        %s654 = smul.addr %s653, 16
        %s655 = scalar_lea.vmem [#allocation4], %s654
        // Predicated region
        $region61: #{tpu_custom_call.1} parent=59 // pred_check
          %p656 = pneg %p262
        $region62: #{tpu_custom_call.1} parent=59 // pred_check_branch
          %658 = sbr.rel (%p656) target = $region64
        $region63: #{tpu_custom_call.1} parent=59 // pred_region
          %s659 = smul.u32 2, %s24
          %661 = vsyncadd %s652, 0
          %s662 = smul.addr %s659, 8
          %s663 = scalar_lea.hbm %s10, %s662
          %s664 = sshll.u32 %s655, 4
          %s665 = int_to_ptr.vmem [resolvable:$true] %s664
          %s666 = sshll.u32 %s663, 4
          %s667 = int_to_ptr.hbm [resolvable:$true] %s666
          %672 = dma.vmem_to_hbm [thread:$0]  %s665, 256, %s667, %s652, 128, 128, 8
        $region64: #{tpu_custom_call.1} parent=59 // pred_fallthru
          _
      $region60: #{tpu_custom_call.1} parent=5 // pred_fallthru
        _
      %p673 = scmp.le.s32.totalorder 2, %s19
      // Predicated region
      $region65: #{tpu_custom_call.1} parent=5 // pred_check
        %p674 = pneg %p673
      $region66: #{tpu_custom_call.1} parent=5 // pred_check_branch
        %676 = sbr.rel (%p674) target = $region68
      $region67: #{tpu_custom_call.1} parent=5 // pred_region
        %s677 = ssub.s32 %s19, 2
        // Predicated region
        $region69: #{tpu_custom_call.1} parent=67 // pred_check
          %p678 = pneg %p268
        $region70: #{tpu_custom_call.1} parent=67 // pred_check_branch
          %680 = sbr.rel (%p678) target = $region72
        $region71: #{tpu_custom_call.1} parent=67 // pred_region
          %s681 = sand.u32 %s253, 1
          %s682 = scalar_lea.sflag [#allocation5], %s681
          %s683 = sand.u32 %s253, 1
          %s684 = smul.addr %s683, 16
          %s685 = scalar_lea.vmem [#allocation4], %s684
          %687 = dma.done %s682, 256
        $region72: #{tpu_custom_call.1} parent=67 // pred_fallthru
          _
      $region68: #{tpu_custom_call.1} parent=5 // pred_fallthru
        _
    $region6: #{tpu_custom_call.1} parent=1 // loop_footer
      %s23 = sadd.s32 1, %s19
    $region7: #{tpu_custom_call.1} parent=1 // loop_footer_branch
      %18 = sbr.rel target = $region3
    $region8: #{tpu_custom_call.1} parent=1 // loop_exit
      _
    %688 = vsyncpa [#allocation5], 1
    %s689 = scalar_lea.sflag [#allocation5], 1
    %690 = vsyncpa %s689, 1

</llo_original>
